<compile_context>
chip_gen: v5e
topology: v5e:2x2
jax: 0.10.0
libtpu: 0.0.40
codegen_flags: <defaults>
</compile_context>

<pallas_src>
import functools

import jax
import jax.numpy as jnp
from jax import lax
from jax.experimental import pallas as pl
from jax.experimental.pallas import tpu as pltpu

# ---------------- problem configuration (small, deterministic) ----------------
B = 2          # batch
CIN = 8        # io_channels  <B, Sc>
H = 32         # hidden_channels <H>
T = 64         # sequence length  (B*T = 128 -> lane dense)
K = 3          # depthwise kernel size <P>
DIL = 2        # dilation
PAD = DIL * (K - 1) // 2
EPS = 1e-8
NB = 128       # padded one-hot width for the GN stats matmuls (lane dense)


# --------------------------------- kernel -------------------------------------
# Packed per-channel parameter slab hp: shape (3+K, H, 1), row order:
#   0: gn1 gamma   1: gn1 beta
#   2..2+K-1: depthwise taps   2+K: depthwise bias
def conv_block_kernel(x_ref, w1_ref, hp_ref, m_ref, mt_ref, wout_ref, bout_ref,
                      alpha_ref, out_ref, *, k_size, dilation, pad, seq_len,
                      eps):
    f32 = jnp.float32
    x = x_ref[...].astype(f32)                       # (CIN+1, B*T)
    bt = x.shape[1]
    hidden = w1_ref.shape[0]

    lane = lax.broadcasted_iota(jnp.int32, (1, bt), 1)
    t_in = lane % seq_len                            # within-sample time index

    a1 = alpha_ref[0]                                # PReLU alphas from SMEM
    a2 = alpha_ref[1]

    def prelu(z, a):
        return jnp.where(z >= 0, z, a * z)

    inv_n = 1.0 / float(hidden * seq_len)

    def gn_stats(z):
        # One sublane-reduce pair + two tiny MXU matmuls; no per-sample
        # lane-to-scalar reductions / scalar broadcasts on the critical path.
        zsum = jnp.sum(z, axis=0, keepdims=True)                 # (1, B*T)
        zsq = jnp.sum(z * z, axis=0, keepdims=True)              # (1, B*T)
        stacked = jnp.concatenate([zsum, zsq], axis=0)           # (2, B*T)
        per_b = jnp.dot(stacked, m_ref[...],
                        preferred_element_type=f32)              # (2, NB)
        mean = per_b[0:1] * inv_n                                # (1, NB)
        ex2 = per_b[1:2] * inv_n
        var = jnp.maximum(ex2 - mean * mean, 0.0)                # clamp >= 0
        inv_std = lax.rsqrt(var + eps)
        rows = jnp.dot(jnp.concatenate([mean, inv_std], axis=0), mt_ref[...],
                       preferred_element_type=f32)               # (2, B*T)
        return rows[0:1], rows[1:2]                              # mean, inv_std

    # ---- 1x1 conv (bias folded into w1) -> PReLU -> GroupNorm1 ----
    y = jnp.dot(w1_ref[...], x, preferred_element_type=f32)      # (H, B*T)
    y = prelu(y, a1)
    mean_row, inv_row = gn_stats(y)
    y = (y - mean_row) * inv_row * hp_ref[0] + hp_ref[1]

    # ---- depthwise dilated conv: per-tap roll + boundary mask only ----
    out = jnp.zeros_like(y)
    for p in range(k_size):
        offset = p * dilation - pad                  # static python int
        if offset == 0:
            tap = y
        else:
            # non-negative shift; wraparound across the batch seam is masked.
            tap = pltpu.roll(y, shift=(-offset) % bt, axis=1)
        if offset < 0:                               # left boundary taps
            tap = jnp.where(t_in >= -offset, tap, 0.0)
        elif offset > 0:                             # right boundary taps
            tap = jnp.where(t_in < seq_len - offset, tap, 0.0)
        out = out + hp_ref[2 + p] * tap              # (H,1) sublane row * (H,B*T)
    out = out + hp_ref[2 + k_size]                   # depthwise bias

    # ---- PReLU -> GroupNorm2 (affine folded into wout/bout in wrapper) ----
    out = prelu(out, a2)
    mean_row, inv_row = gn_stats(out)
    feat = (out - mean_row) * inv_row

    # ---- fused res/skip 1x1 convs: one MXU matmul, lane-dense store ----
    o = jnp.dot(wout_ref[...], feat, preferred_element_type=f32) + bout_ref[...]
    out_ref[...] = o.astype(out_ref.dtype)


# -------------------------------- wrapper --------------------------------------
def conv_block_pallas(x, params, *, no_residual=False):
    """x: (B, CIN, T) float32. Returns (residual_or_None, skip), each (B, CIN, T)."""
    (w1, b1, a1, g1, be1, wdw, bdw, a2, g2, be2, wres, bres, wskip, bskip) = params
    batch, cin, seq = x.shape
    bt = batch * seq
    assert bt % 128 == 0, "lane-packed batch*time must be a multiple of 128"

    # Lane-pack the batch and append a ones row for the folded conv1 bias.
    x2 = jnp.transpose(x, (1, 0, 2)).reshape(cin, bt)
    x2 = jnp.concatenate([x2, jnp.ones((1, bt), x2.dtype)], axis=0)  # (CIN+1, B*T)

    # Fold b1 into the first matmul: w1a = [w1 | b1].
    w1a = jnp.concatenate([w1, b1[:, None]], axis=1).astype(jnp.float32)  # (H, CIN+1)

    # Per-channel param slab: gn1 gamma/beta, K depthwise taps, dw bias.
    k_size = wdw.shape[1]
    hp = jnp.stack([g1, be1] + [wdw[:, p] for p in range(k_size)] + [bdw],
                   axis=0)[..., None].astype(jnp.float32)                 # (3+K, H, 1)

    # Fuse res/skip and fold gn2's affine into the output matmul:
    #   wout' = wout * g2,   bout' = bout + wout @ be2
    if no_residual:
        wout = wskip                                             # (CIN, H)
        bout = bskip
    else:
        wout = jnp.concatenate([wres, wskip], axis=0)            # (2*CIN, H)
        bout = jnp.concatenate([bres, bskip], axis=0)
    wout_f = (wout * g2[None, :]).astype(jnp.float32)
    bout_f = (bout + wout @ be2)[:, None].astype(jnp.float32)    # (O, 1)

    alphas = jnp.stack([a1, a2]).astype(jnp.float32)             # (2,) -> SMEM

    # One-hot lane->sample matrices for the MXU GroupNorm reductions,
    # padded to 128 columns so every stats matmul stays lane-dense.
    lane_b = jnp.arange(bt, dtype=jnp.int32) // seq
    onehot = (lane_b[:, None] == jnp.arange(NB, dtype=jnp.int32)[None, :]
              ).astype(jnp.float32)                              # (B*T, NB)
    onehot_t = onehot.T                                          # (NB, B*T)

    kernel = functools.partial(
        conv_block_kernel, k_size=k_size, dilation=DIL, pad=PAD,
        seq_len=seq, eps=EPS,
    )

    vmem = pl.BlockSpec(memory_space=pltpu.MemorySpace.VMEM)
    smem = pl.BlockSpec(memory_space=pltpu.MemorySpace.SMEM)

    out = pl.pallas_call(
        kernel,
        out_shape=jax.ShapeDtypeStruct((wout_f.shape[0], bt), x.dtype),
        in_specs=[vmem, vmem, vmem, vmem, vmem, vmem, vmem, smem],
        out_specs=vmem,
    )(x2, w1a, hp, onehot, onehot_t, wout_f, bout_f, alphas)

    def unpack(rows):   # (CIN, B*T) -> (B, CIN, T)
        return jnp.transpose(rows.reshape(cin, batch, seq), (1, 0, 2))

    if no_residual:
        return None, unpack(out)
    return unpack(out[:cin]), unpack(out[cin:])


# --------------------------- pure-JAX reference --------------------------------
def conv_block_ref(x, params, *, no_residual=False):
    (w1, b1, a1, g1, be1, wdw, bdw, a2, g2, be2, wres, bres, wskip, bskip) = params

    def prelu(z, alpha):
        return jnp.where(z >= 0, z, alpha * z)

    def gn(z, gamma, beta):
        mean = z.mean(axis=(1, 2), keepdims=True)
        var = ((z - mean) ** 2).mean(axis=(1, 2), keepdims=True)
        return (z - mean) / jnp.sqrt(var + EPS) * gamma[None, :, None] + beta[None, :, None]

    y = jnp.einsum("hc,bct->bht", w1, x) + b1[None, :, None]
    y = gn(prelu(y, a1), g1, be1)
    y = lax.conv_general_dilated(
        y, wdw.reshape(H, 1, K), window_strides=(1,), padding=[(PAD, PAD)],
        rhs_dilation=(DIL,), feature_group_count=H,
        dimension_numbers=("NCH", "OIH", "NCH"),
    ) + bdw[None, :, None]
    feat = gn(prelu(y, a2), g2, be2)
    skip = jnp.einsum("oh,bht->bot", wskip, feat) + bskip[None, :, None]
    if no_residual:
        return None, skip
    res = jnp.einsum("oh,bht->bot", wres, feat) + bres[None, :, None]
    return res, skip


# ----------------------------------- main ---------------------------------------
if __name__ == "__main__":
    key = jax.random.PRNGKey(0)
    ks = jax.random.split(key, 16)
    f32 = jnp.float32

    x = jax.random.normal(ks[0], (B, CIN, T), dtype=f32)

    # Deterministic synthetic parameters (shapes match the torch module).
    w1 = jax.random.normal(ks[1], (H, CIN), dtype=f32) * 0.3
    b1 = jax.random.normal(ks[2], (H,), dtype=f32) * 0.1
    a1 = jnp.asarray(0.25, dtype=f32)                         # PReLU default init
    g1 = 1.0 + 0.1 * jax.random.normal(ks[3], (H,), dtype=f32)
    be1 = 0.1 * jax.random.normal(ks[4], (H,), dtype=f32)
    wdw = jax.random.normal(ks[5], (H, K), dtype=f32) * 0.3   # depthwise (H,1,K) squeezed
    bdw = jax.random.normal(ks[6], (H,), dtype=f32) * 0.1
    a2 = jnp.asarray(0.25, dtype=f32)
    g2 = 1.0 + 0.1 * jax.random.normal(ks[7], (H,), dtype=f32)
    be2 = 0.1 * jax.random.normal(ks[8], (H,), dtype=f32)
    wres = jax.random.normal(ks[9], (CIN, H), dtype=f32) * 0.2
    bres = jax.random.normal(ks[10], (CIN,), dtype=f32) * 0.1
    wskip = jax.random.normal(ks[11], (CIN, H), dtype=f32) * 0.2
    bskip = jax.random.normal(ks[12], (CIN,), dtype=f32) * 0.1

    flat_params = (w1, b1, a1, g1, be1, wdw, bdw, a2, g2, be2,
                   wres, bres, wskip, bskip)

    # --- residual path ---
    residual, skip = conv_block_pallas(x, flat_params, no_residual=False)
    jax.block_until_ready((residual, skip))
    res_ref, skip_ref = conv_block_ref(x, flat_params, no_residual=False)
    assert jnp.allclose(residual, res_ref, rtol=1e-4, atol=1e-4), "residual mismatch"
    assert jnp.allclose(skip, skip_ref, rtol=1e-4, atol=1e-4), "skip mismatch"

    # --- no-residual path ---
    none_res, skip_nr = conv_block_pallas(x, flat_params, no_residual=True)
    jax.block_until_ready(skip_nr)
    _, skip_nr_ref = conv_block_ref(x, flat_params, no_residual=True)
    assert none_res is None
    assert jnp.allclose(skip_nr, skip_nr_ref, rtol=1e-4, atol=1e-4), "no-residual skip mismatch"

    print("KERNEL_OK")
</pallas_src>

<mosaic_0001>
module attributes {stable_mosaic.version = 11 : i64} {
  func.func @conv_block_kernel(%arg0: memref<9x128xf32, #tpu.memory_space<vmem>>, %arg1: memref<32x9xf32, #tpu.memory_space<vmem>>, %arg2: memref<6x32x1xf32, #tpu.memory_space<vmem>>, %arg3: memref<128x128xf32, #tpu.memory_space<vmem>>, %arg4: memref<128x128xf32, #tpu.memory_space<vmem>>, %arg5: memref<16x32xf32, #tpu.memory_space<vmem>>, %arg6: memref<16x1xf32, #tpu.memory_space<vmem>>, %arg7: memref<2xf32, #tpu.memory_space<smem>>, %arg8: memref<16x128xf32, #tpu.memory_space<vmem>>) attributes {dimension_semantics = [], scalar_prefetch = 0 : i64, scratch_operands = 0 : i64, tpu.core_type = #tpu.core_type<tc>} {
    %c0 = arith.constant 0 : index
    %c0_0 = arith.constant 0 : index
    %0 = vector.load %arg0[%c0, %c0_0] : memref<9x128xf32, #tpu.memory_space<vmem>>, vector<9x128xf32>
    %1 = tpu.iota {dimensions = array<i32: 1>} : vector<1x128xi32>
    %c64_i32 = arith.constant 64 : i32
    %c0_i32 = arith.constant 0 : i32
    %2 = arith.cmpi eq, %c64_i32, %c0_i32 : i32
    %c1_i32 = arith.constant 1 : i32
    %3 = arith.select %2, %c1_i32, %c64_i32 : i32
    %4 = vector.broadcast %3 : i32 to vector<1x128xi32>
    %5 = arith.remsi %1, %4 : vector<1x128xi32>
    %c0_i32_1 = arith.constant 0 : i32
    %6 = vector.broadcast %c0_i32_1 : i32 to vector<1x128xi32>
    %7 = arith.cmpi ne, %5, %6 : vector<1x128xi32>
    %c0_i32_2 = arith.constant 0 : i32
    %8 = vector.broadcast %c0_i32_2 : i32 to vector<1x128xi32>
    %9 = arith.cmpi slt, %5, %8 : vector<1x128xi32>
    %c0_i32_3 = arith.constant 0 : i32
    %10 = arith.cmpi slt, %3, %c0_i32_3 : i32
    %11 = vector.broadcast %10 : i1 to vector<1x128xi1>
    %12 = vector.broadcast %11 : vector<1x128xi1> to vector<1x128xi1>
    %13 = arith.xori %9, %12 : vector<1x128xi1>
    %14 = arith.andi %13, %7 : vector<1x128xi1>
    %15 = vector.broadcast %3 : i32 to vector<1x128xi32>
    %16 = arith.addi %5, %15 : vector<1x128xi32>
    %17 = arith.select %14, %16, %5 : vector<1x128xi1>, vector<1x128xi32>
    %c0_4 = arith.constant 0 : index
    %18 = memref.load %arg7[%c0_4] : memref<2xf32, #tpu.memory_space<smem>>
    %c1 = arith.constant 1 : index
    %19 = memref.load %arg7[%c1] : memref<2xf32, #tpu.memory_space<smem>>
    %c0_5 = arith.constant 0 : index
    %c0_6 = arith.constant 0 : index
    %20 = vector.load %arg1[%c0_5, %c0_6] : memref<32x9xf32, #tpu.memory_space<vmem>>, vector<32x9xf32>
    %cst = arith.constant dense<0.000000e+00> : vector<32x128xf32>
    %21 = tpu.matmul %20, %0, %cst {dimension_numbers = #tpu.dot_dimension_numbers<[1], [0], [0], [1], [0, 0, 1, 1], [], []>} : vector<32x9xf32>, vector<9x128xf32>, vector<32x128xf32> -> vector<32x128xf32>
    %cst_7 = arith.constant 0.000000e+00 : f32
    %22 = vector.broadcast %cst_7 : f32 to vector<32x128xf32>
    %23 = arith.cmpf oge, %21, %22 : vector<32x128xf32>
    %24 = vector.broadcast %18 : f32 to vector<32x128xf32>
    %25 = arith.mulf %24, %21 : vector<32x128xf32>
    %26 = arith.select %23, %21, %25 : vector<32x128xi1>, vector<32x128xf32>
    %cst_8 = arith.constant dense<0.000000e+00> : vector<128xf32>
    %27 = vector.multi_reduction <add>, %26, %cst_8 [0] : vector<32x128xf32> to vector<128xf32>
    %28 = vector.shape_cast %27 : vector<128xf32> to vector<1x128xf32>
    %29 = arith.mulf %26, %26 : vector<32x128xf32>
    %cst_9 = arith.constant dense<0.000000e+00> : vector<128xf32>
    %30 = vector.multi_reduction <add>, %29, %cst_9 [0] : vector<32x128xf32> to vector<128xf32>
    %31 = vector.shape_cast %30 : vector<128xf32> to vector<1x128xf32>
    %32 = tpu.concatenate %28, %31 in 0 : vector<1x128xf32>, vector<1x128xf32> -> vector<2x128xf32>
    %c0_10 = arith.constant 0 : index
    %c0_11 = arith.constant 0 : index
    %33 = vector.load %arg3[%c0_10, %c0_11] : memref<128x128xf32, #tpu.memory_space<vmem>>, vector<128x128xf32>
    %cst_12 = arith.constant dense<0.000000e+00> : vector<2x128xf32>
    %34 = tpu.matmul %32, %33, %cst_12 {dimension_numbers = #tpu.dot_dimension_numbers<[1], [0], [0], [1], [0, 0, 1, 1], [], []>} : vector<2x128xf32>, vector<128x128xf32>, vector<2x128xf32> -> vector<2x128xf32>
    %35 = vector.extract_strided_slice %34 {offsets = [0, 0], sizes = [1, 128], strides = [1, 1]} : vector<2x128xf32> to vector<1x128xf32>
    %cst_13 = arith.constant 4.8828125E-4 : f32
    %36 = vector.broadcast %cst_13 : f32 to vector<1x128xf32>
    %37 = arith.mulf %35, %36 : vector<1x128xf32>
    %38 = vector.extract_strided_slice %34 {offsets = [1, 0], sizes = [1, 128], strides = [1, 1]} : vector<2x128xf32> to vector<1x128xf32>
    %cst_14 = arith.constant 4.8828125E-4 : f32
    %39 = vector.broadcast %cst_14 : f32 to vector<1x128xf32>
    %40 = arith.mulf %38, %39 : vector<1x128xf32>
    %41 = arith.mulf %37, %37 : vector<1x128xf32>
    %42 = arith.subf %40, %41 : vector<1x128xf32>
    %cst_15 = arith.constant 0.000000e+00 : f32
    %43 = vector.broadcast %cst_15 : f32 to vector<1x128xf32>
    %44 = arith.maximumf %42, %43 : vector<1x128xf32>
    %cst_16 = arith.constant 9.99999993E-9 : f32
    %45 = vector.broadcast %cst_16 : f32 to vector<1x128xf32>
    %46 = arith.addf %44, %45 : vector<1x128xf32>
    %47 = math.rsqrt %46 : vector<1x128xf32>
    %48 = tpu.concatenate %37, %47 in 0 : vector<1x128xf32>, vector<1x128xf32> -> vector<2x128xf32>
    %c0_17 = arith.constant 0 : index
    %c0_18 = arith.constant 0 : index
    %49 = vector.load %arg4[%c0_17, %c0_18] : memref<128x128xf32, #tpu.memory_space<vmem>>, vector<128x128xf32>
    %cst_19 = arith.constant dense<0.000000e+00> : vector<2x128xf32>
    %50 = tpu.matmul %48, %49, %cst_19 {dimension_numbers = #tpu.dot_dimension_numbers<[1], [0], [0], [1], [0, 0, 1, 1], [], []>} : vector<2x128xf32>, vector<128x128xf32>, vector<2x128xf32> -> vector<2x128xf32>
    %51 = vector.extract_strided_slice %50 {offsets = [0, 0], sizes = [1, 128], strides = [1, 1]} : vector<2x128xf32> to vector<1x128xf32>
    %52 = vector.extract_strided_slice %50 {offsets = [1, 0], sizes = [1, 128], strides = [1, 1]} : vector<2x128xf32> to vector<1x128xf32>
    %53 = vector.broadcast %51 : vector<1x128xf32> to vector<32x128xf32>
    %54 = arith.subf %26, %53 : vector<32x128xf32>
    %55 = vector.broadcast %52 : vector<1x128xf32> to vector<32x128xf32>
    %56 = arith.mulf %54, %55 : vector<32x128xf32>
    %c0_20 = arith.constant 0 : index
    %c0_21 = arith.constant 0 : index
    %c0_22 = arith.constant 0 : index
    %57 = vector.load %arg2[%c0_20, %c0_21, %c0_22] : memref<6x32x1xf32, #tpu.memory_space<vmem>>, vector<1x32x1xf32>
    %58 = vector.shape_cast %57 : vector<1x32x1xf32> to vector<32x1xf32>
    %59 = vector.broadcast %58 : vector<32x1xf32> to vector<32x128xf32>
    %60 = arith.mulf %56, %59 : vector<32x128xf32>
    %c1_23 = arith.constant 1 : index
    %c0_24 = arith.constant 0 : index
    %c0_25 = arith.constant 0 : index
    %61 = vector.load %arg2[%c1_23, %c0_24, %c0_25] : memref<6x32x1xf32, #tpu.memory_space<vmem>>, vector<1x32x1xf32>
    %62 = vector.shape_cast %61 : vector<1x32x1xf32> to vector<32x1xf32>
    %63 = vector.broadcast %62 : vector<32x1xf32> to vector<32x128xf32>
    %64 = arith.addf %60, %63 : vector<32x128xf32>
    %cst_26 = arith.constant 0.000000e+00 : f32
    %65 = vector.broadcast %cst_26 : f32 to vector<32x128xf32>
    %c2_i32 = arith.constant 2 : i32
    %66 = tpu.dynamic_rotate %64 by %c2_i32 dim 1 : vector<32x128xf32>, i32 -> vector<32x128xf32>
    %c2_i32_27 = arith.constant 2 : i32
    %67 = vector.broadcast %c2_i32_27 : i32 to vector<1x128xi32>
    %68 = arith.cmpi sge, %17, %67 : vector<1x128xi32>
    %cst_28 = arith.constant 0.000000e+00 : f32
    %69 = vector.shape_cast %68 : vector<1x128xi1> to vector<1x128xi1>
    %70 = vector.broadcast %69 : vector<1x128xi1> to vector<32x128xi1>
    %71 = vector.broadcast %cst_28 : f32 to vector<32x128xf32>
    %72 = arith.select %70, %66, %71 : vector<32x128xi1>, vector<32x128xf32>
    %c2 = arith.constant 2 : index
    %c0_29 = arith.constant 0 : index
    %c0_30 = arith.constant 0 : index
    %73 = vector.load %arg2[%c2, %c0_29, %c0_30] : memref<6x32x1xf32, #tpu.memory_space<vmem>>, vector<1x32x1xf32>
    %74 = vector.shape_cast %73 : vector<1x32x1xf32> to vector<32x1xf32>
    %75 = vector.broadcast %74 : vector<32x1xf32> to vector<32x128xf32>
    %76 = arith.mulf %75, %72 : vector<32x128xf32>
    %77 = arith.addf %65, %76 : vector<32x128xf32>
    %c3 = arith.constant 3 : index
    %c0_31 = arith.constant 0 : index
    %c0_32 = arith.constant 0 : index
    %78 = vector.load %arg2[%c3, %c0_31, %c0_32] : memref<6x32x1xf32, #tpu.memory_space<vmem>>, vector<1x32x1xf32>
    %79 = vector.shape_cast %78 : vector<1x32x1xf32> to vector<32x1xf32>
    %80 = vector.broadcast %79 : vector<32x1xf32> to vector<32x128xf32>
    %81 = arith.mulf %80, %64 : vector<32x128xf32>
    %82 = arith.addf %77, %81 : vector<32x128xf32>
    %c126_i32 = arith.constant 126 : i32
    %83 = tpu.dynamic_rotate %64 by %c126_i32 dim 1 : vector<32x128xf32>, i32 -> vector<32x128xf32>
    %c62_i32 = arith.constant 62 : i32
    %84 = vector.broadcast %c62_i32 : i32 to vector<1x128xi32>
    %85 = arith.cmpi slt, %17, %84 : vector<1x128xi32>
    %cst_33 = arith.constant 0.000000e+00 : f32
    %86 = vector.shape_cast %85 : vector<1x128xi1> to vector<1x128xi1>
    %87 = vector.broadcast %86 : vector<1x128xi1> to vector<32x128xi1>
    %88 = vector.broadcast %cst_33 : f32 to vector<32x128xf32>
    %89 = arith.select %87, %83, %88 : vector<32x128xi1>, vector<32x128xf32>
    %c4 = arith.constant 4 : index
    %c0_34 = arith.constant 0 : index
    %c0_35 = arith.constant 0 : index
    %90 = vector.load %arg2[%c4, %c0_34, %c0_35] : memref<6x32x1xf32, #tpu.memory_space<vmem>>, vector<1x32x1xf32>
    %91 = vector.shape_cast %90 : vector<1x32x1xf32> to vector<32x1xf32>
    %92 = vector.broadcast %91 : vector<32x1xf32> to vector<32x128xf32>
    %93 = arith.mulf %92, %89 : vector<32x128xf32>
    %94 = arith.addf %82, %93 : vector<32x128xf32>
    %c5 = arith.constant 5 : index
    %c0_36 = arith.constant 0 : index
    %c0_37 = arith.constant 0 : index
    %95 = vector.load %arg2[%c5, %c0_36, %c0_37] : memref<6x32x1xf32, #tpu.memory_space<vmem>>, vector<1x32x1xf32>
    %96 = vector.shape_cast %95 : vector<1x32x1xf32> to vector<32x1xf32>
    %97 = vector.broadcast %96 : vector<32x1xf32> to vector<32x128xf32>
    %98 = arith.addf %94, %97 : vector<32x128xf32>
    %cst_38 = arith.constant 0.000000e+00 : f32
    %99 = vector.broadcast %cst_38 : f32 to vector<32x128xf32>
    %100 = arith.cmpf oge, %98, %99 : vector<32x128xf32>
    %101 = vector.broadcast %19 : f32 to vector<32x128xf32>
    %102 = arith.mulf %101, %98 : vector<32x128xf32>
    %103 = arith.select %100, %98, %102 : vector<32x128xi1>, vector<32x128xf32>
    %cst_39 = arith.constant dense<0.000000e+00> : vector<128xf32>
    %104 = vector.multi_reduction <add>, %103, %cst_39 [0] : vector<32x128xf32> to vector<128xf32>
    %105 = vector.shape_cast %104 : vector<128xf32> to vector<1x128xf32>
    %106 = arith.mulf %103, %103 : vector<32x128xf32>
    %cst_40 = arith.constant dense<0.000000e+00> : vector<128xf32>
    %107 = vector.multi_reduction <add>, %106, %cst_40 [0] : vector<32x128xf32> to vector<128xf32>
    %108 = vector.shape_cast %107 : vector<128xf32> to vector<1x128xf32>
    %109 = tpu.concatenate %105, %108 in 0 : vector<1x128xf32>, vector<1x128xf32> -> vector<2x128xf32>
    %c0_41 = arith.constant 0 : index
    %c0_42 = arith.constant 0 : index
    %110 = vector.load %arg3[%c0_41, %c0_42] : memref<128x128xf32, #tpu.memory_space<vmem>>, vector<128x128xf32>
    %cst_43 = arith.constant dense<0.000000e+00> : vector<2x128xf32>
    %111 = tpu.matmul %109, %110, %cst_43 {dimension_numbers = #tpu.dot_dimension_numbers<[1], [0], [0], [1], [0, 0, 1, 1], [], []>} : vector<2x128xf32>, vector<128x128xf32>, vector<2x128xf32> -> vector<2x128xf32>
    %112 = vector.extract_strided_slice %111 {offsets = [0, 0], sizes = [1, 128], strides = [1, 1]} : vector<2x128xf32> to vector<1x128xf32>
    %cst_44 = arith.constant 4.8828125E-4 : f32
    %113 = vector.broadcast %cst_44 : f32 to vector<1x128xf32>
    %114 = arith.mulf %112, %113 : vector<1x128xf32>
    %115 = vector.extract_strided_slice %111 {offsets = [1, 0], sizes = [1, 128], strides = [1, 1]} : vector<2x128xf32> to vector<1x128xf32>
    %cst_45 = arith.constant 4.8828125E-4 : f32
    %116 = vector.broadcast %cst_45 : f32 to vector<1x128xf32>
    %117 = arith.mulf %115, %116 : vector<1x128xf32>
    %118 = arith.mulf %114, %114 : vector<1x128xf32>
    %119 = arith.subf %117, %118 : vector<1x128xf32>
    %cst_46 = arith.constant 0.000000e+00 : f32
    %120 = vector.broadcast %cst_46 : f32 to vector<1x128xf32>
    %121 = arith.maximumf %119, %120 : vector<1x128xf32>
    %cst_47 = arith.constant 9.99999993E-9 : f32
    %122 = vector.broadcast %cst_47 : f32 to vector<1x128xf32>
    %123 = arith.addf %121, %122 : vector<1x128xf32>
    %124 = math.rsqrt %123 : vector<1x128xf32>
    %125 = tpu.concatenate %114, %124 in 0 : vector<1x128xf32>, vector<1x128xf32> -> vector<2x128xf32>
    %c0_48 = arith.constant 0 : index
    %c0_49 = arith.constant 0 : index
    %126 = vector.load %arg4[%c0_48, %c0_49] : memref<128x128xf32, #tpu.memory_space<vmem>>, vector<128x128xf32>
    %cst_50 = arith.constant dense<0.000000e+00> : vector<2x128xf32>
    %127 = tpu.matmul %125, %126, %cst_50 {dimension_numbers = #tpu.dot_dimension_numbers<[1], [0], [0], [1], [0, 0, 1, 1], [], []>} : vector<2x128xf32>, vector<128x128xf32>, vector<2x128xf32> -> vector<2x128xf32>
    %128 = vector.extract_strided_slice %127 {offsets = [0, 0], sizes = [1, 128], strides = [1, 1]} : vector<2x128xf32> to vector<1x128xf32>
    %129 = vector.extract_strided_slice %127 {offsets = [1, 0], sizes = [1, 128], strides = [1, 1]} : vector<2x128xf32> to vector<1x128xf32>
    %130 = vector.broadcast %128 : vector<1x128xf32> to vector<32x128xf32>
    %131 = arith.subf %103, %130 : vector<32x128xf32>
    %132 = vector.broadcast %129 : vector<1x128xf32> to vector<32x128xf32>
    %133 = arith.mulf %131, %132 : vector<32x128xf32>
    %c0_51 = arith.constant 0 : index
    %c0_52 = arith.constant 0 : index
    %134 = vector.load %arg5[%c0_51, %c0_52] : memref<16x32xf32, #tpu.memory_space<vmem>>, vector<16x32xf32>
    %cst_53 = arith.constant dense<0.000000e+00> : vector<16x128xf32>
    %135 = tpu.matmul %134, %133, %cst_53 {dimension_numbers = #tpu.dot_dimension_numbers<[1], [0], [0], [1], [0, 0, 1, 1], [], []>} : vector<16x32xf32>, vector<32x128xf32>, vector<16x128xf32> -> vector<16x128xf32>
    %c0_54 = arith.constant 0 : index
    %c0_55 = arith.constant 0 : index
    %136 = vector.load %arg6[%c0_54, %c0_55] : memref<16x1xf32, #tpu.memory_space<vmem>>, vector<16x1xf32>
    %137 = vector.broadcast %136 : vector<16x1xf32> to vector<16x128xf32>
    %138 = arith.addf %135, %137 : vector<16x128xf32>
    %c0_56 = arith.constant 0 : index
    %c0_57 = arith.constant 0 : index
    %139 = vector.load %arg8[%c0_56, %c0_57] : memref<16x128xf32, #tpu.memory_space<vmem>>, vector<16x128xf32>
    tpu.vector_store %arg8[%c0_56, %c0_57], %138 {strides = array<i32>} : memref<16x128xf32, #tpu.memory_space<vmem>>, vector<16x128xf32>,
    return
  }
}

</mosaic_0001>

<llo_original>
// kernel: tpu_custom_call.1
$region0: #{tpu_custom_call.1}
  #allocation0 [shape = 'u32[]', space=smem, size = 0x4, offset = 0x4, fixed_abs, tag = 'smem constant byte address 0x4 - core index']
  #allocation1 [shape = 'u32[72,128]{1,0:T(1,128)}', space=vmem, size = 0x9000, scoped, tag = 'internal scratch']
  %s0 = inlined_call_operand.vmem [shape: f32[9,128], index: 0, kind: input, shape index: {}]
  %s1 = inlined_call_operand.vmem [shape: f32[32,9], index: 1, kind: input, shape index: {}]
  %s2 = inlined_call_operand.vmem [shape: f32[6,32,1], index: 2, kind: input, shape index: {}]
  %s3 = inlined_call_operand.vmem [shape: f32[128,128], index: 3, kind: input, shape index: {}]
  %s4 = inlined_call_operand.hbm [shape: f32[128,128], index: 4, kind: input, shape index: {}]
  %s5 = inlined_call_operand.vmem [shape: f32[16,32], index: 5, kind: input, shape index: {}]
  %s6 = inlined_call_operand.vmem [shape: f32[16,1], index: 6, kind: input, shape index: {}]
  %s7 = inlined_call_operand.vmem [shape: f32[2], index: 7, kind: input, shape index: {}]
  %s8 = inlined_call_operand.hbm [shape: f32[16,128], index: 8, kind: output, shape index: {}]
  %s9 = sld [smem:[#allocation0]]
  $region50: #{tpu_custom_call.1} parent=0
    _
  %s11 = ssub.s32 1, %s9
  %s12 = scalar_select 0, %s11, %s9
  $region1: #{tpu_custom_call.1} parent=0
    #allocation2 [shape = 'u8[65536]{0}', space=vmem, size = 0x10000, scoped, tag = 'input window, operand 4, single buffered']
    #allocation3 [shape = 's32[1]{0}', space=sflag, size = 0x4, scoped, tag = 'scoped memory for tpu_custom_call.1']
    #allocation4 [shape = 's32[1]{0}', space=sflag, size = 0x4, scoped, tag = 'scoped memory for tpu_custom_call.1']
    #allocation5 [shape = 's32[1]{0}', space=sflag, size = 0x4, scoped, tag = 'scoped memory for tpu_custom_call.1']
    #allocation6 [shape = 'u8[512]{0}', space=smem, size = 0x200, scoped, tag = 'input window, operand 7, single buffered']
    #allocation7 [shape = 'u8[8192]{0}', space=vmem, size = 0x2000, scoped, tag = 'output window, operand 0, single buffered']
    %13 = vsyncpa [#allocation3], 0
    %14 = vsyncpa [#allocation5], 0
    %15 = vsyncpa [#allocation4], 0
    // Predicated region
    $region2: #{tpu_custom_call.1} parent=1 // pred_check
      _
    $region3: #{tpu_custom_call.1} parent=1 // pred_check_branch
      %17 = sbr.rel (0) target = $region5
    $region4: #{tpu_custom_call.1} parent=1 // pred_region
      _
    $region5: #{tpu_custom_call.1} parent=1 // pred_fallthru
      _
    // Predicated region
    $region6: #{tpu_custom_call.1} parent=1 // pred_check
      _
    $region7: #{tpu_custom_call.1} parent=1 // pred_check_branch
      %19 = sbr.rel (0) target = $region9
    $region8: #{tpu_custom_call.1} parent=1 // pred_region
      _
    $region9: #{tpu_custom_call.1} parent=1 // pred_fallthru
      _
    // Predicated region
    $region10: #{tpu_custom_call.1} parent=1 // pred_check
      _
    $region11: #{tpu_custom_call.1} parent=1 // pred_check_branch
      %21 = sbr.rel (0) target = $region13
    $region12: #{tpu_custom_call.1} parent=1 // pred_region
      _
    $region13: #{tpu_custom_call.1} parent=1 // pred_fallthru
      _
    // Predicated region
    $region14: #{tpu_custom_call.1} parent=1 // pred_check
      _
    $region15: #{tpu_custom_call.1} parent=1 // pred_check_branch
      %23 = sbr.rel (0) target = $region17
    $region16: #{tpu_custom_call.1} parent=1 // pred_region
      _
    $region17: #{tpu_custom_call.1} parent=1 // pred_fallthru
      _
    // Predicated region
    $region18: #{tpu_custom_call.1} parent=1 // pred_check
      _
    $region19: #{tpu_custom_call.1} parent=1 // pred_check_branch
      %25 = sbr.rel (0) target = $region21
    $region20: #{tpu_custom_call.1} parent=1 // pred_region
      %27 = vsyncadd [#allocation3], 0
      %s28 = sshll.u32 %s4, 4
      %s29 = int_to_ptr.hbm [resolvable:$true] %s28
      %s30 = sshll.u32 [#allocation2], 4
      %s31 = int_to_ptr.vmem [resolvable:$true] %s30
      %36 = dma.hbm_to_vmem [thread:$0]  %s29, 2048, %s31, [#allocation3], 128, 128, 8
    $region21: #{tpu_custom_call.1} parent=1 // pred_fallthru
      _
    // Predicated region
    $region22: #{tpu_custom_call.1} parent=1 // pred_check
      _
    $region23: #{tpu_custom_call.1} parent=1 // pred_check_branch
      %38 = sbr.rel (0) target = $region25
    $region24: #{tpu_custom_call.1} parent=1 // pred_region
      _
    $region25: #{tpu_custom_call.1} parent=1 // pred_fallthru
      _
    // Predicated region
    $region26: #{tpu_custom_call.1} parent=1 // pred_check
      _
    $region27: #{tpu_custom_call.1} parent=1 // pred_check_branch
      %40 = sbr.rel (0) target = $region29
    $region28: #{tpu_custom_call.1} parent=1 // pred_region
      _
    $region29: #{tpu_custom_call.1} parent=1 // pred_fallthru
      _
    // Predicated region
    $region30: #{tpu_custom_call.1} parent=1 // pred_check
      _
    $region31: #{tpu_custom_call.1} parent=1 // pred_check_branch
      %42 = sbr.rel (0) target = $region33
    $region32: #{tpu_custom_call.1} parent=1 // pred_region
      %44 = vsyncadd [#allocation5], 0
      %s46 = sshll.u32 %s7, 4
      %s47 = int_to_ptr.vmem [resolvable:$true] %s46
      %49 = dma.vmem_to_smem %s47, 16, [#allocation6], [#allocation5]
    $region33: #{tpu_custom_call.1} parent=1 // pred_fallthru
      _
    // Predicated region
    $region34: #{tpu_custom_call.1} parent=1 // pred_check
      _
    $region35: #{tpu_custom_call.1} parent=1 // pred_check_branch
      %51 = sbr.rel (0) target = $region37
    $region36: #{tpu_custom_call.1} parent=1 // pred_region
      %53 = dma.done [#allocation3], 2048
    $region37: #{tpu_custom_call.1} parent=1 // pred_fallthru
      _
    // Predicated region
    $region38: #{tpu_custom_call.1} parent=1 // pred_check
      _
    $region39: #{tpu_custom_call.1} parent=1 // pred_check_branch
      %55 = sbr.rel (0) target = $region41
    $region40: #{tpu_custom_call.1} parent=1 // pred_region
      %57 = dma.done [#allocation5], 16
    $region41: #{tpu_custom_call.1} parent=1 // pred_fallthru
      _
    %58 = sfence
    %v59 = vld [vmem:[%s0] sm:$0xff]
    %v60 = vld [vmem:[%s0 + $0x8] sm:$0x1]
    %v61 = vlaneseq
    %v62 = vand.u32 %v61, 127
    %vm63 = vcmp.lt.s32.totalorder %v62, 0
    %v64 = vsub.s32 0, %v62
    %v65 = vsel %vm63, %v64, %v62
    %v66 = vshrl.u32 %v65, 6
    %v67 = vand.u32 %v65, 63
    %v68 = vsub.s32 0, %v67
    %v69 = vsel %vm63, %v68, %v67
    %vm70 = vcmp.ne.s32.totalorder %v69, 0
    %vm71 = vcmp.lt.s32.totalorder %v69, 0
    %vm72 = vmand %vm71, %vm70
    %v73 = vadd.s32 %v69, 64
    %v74 = vsel %vm72, %v73, %v69
    %s75 = sld [smem:[#allocation6]]
    %s76 = sld [smem:[#allocation6 + $0x1]]
    %v77 = vld [vmem:[%s1] sm:$0xff]
    %v78 = vld [vmem:[%s1 + $0x8] sm:$0xff]
    %v79 = vld [vmem:[%s1 + $0x10] sm:$0xff]
    %v80 = vld [vmem:[%s1 + $0x18] sm:$0xff]
    %vm81 = vcmask 72704
    %v83 = vsel %vm81, %v77, 0
    %v86 = vsel %vm81, %v78, 0
    %v89 = vsel %vm81, %v79, 0
    %v92 = vsel %vm81, %v80, 0
    %vm94 = vcmask 1040384
    %v96 = vsel %vm94, %v60, 0
    %98 = vmatpush.msra.mxu0 0.0
    %99 = vmatpush.msra.mxu0 0.0
    %100 = vmatpush.msra.mxu0 0.0
    %101 = vmatpush.msra.mxu0 0.0
    %102 = vmatpush.msra.mxu0 0.0
    %103 = vmatpush.msra.mxu0 0.0
    %104 = vmatpush.msra.mxu0 0.0
    %105 = vmatpush.msra.mxu0 0.0
    %106 = vmatpush.msra.mxu0 0.0
    %107 = vmatpush.msra.mxu0 0.0
    %108 = vmatpush.msra.mxu0 0.0
    %109 = vmatpush.msra.mxu0 0.0
    %110 = vmatpush.msra.mxu0 0.0
    %111 = vmatpush.msra.mxu0 0.0
    %112 = vmatpush.msra.mxu0 %v96
    %113 = vmatpush.msra.mxu0 %v59
    %114 = vmatmul.f32.gmra.mxu0 %v83
    %v115 = vpop.f32.mrf.mxu0
    %v116 = vadd.f32 0.0, %v115
    %117 = vmatmul.f32.gmra.mxu0 %v86
    %v118 = vpop.f32.mrf.mxu0
    %v119 = vadd.f32 0.0, %v118
    %120 = vmatmul.f32.gmra.mxu0 %v89
    %v121 = vpop.f32.mrf.mxu0
    %v122 = vadd.f32 0.0, %v121
    %123 = vmatmul.f32.gmra.mxu0 %v92
    %v124 = vpop.f32.mrf.mxu0
    %v125 = vadd.f32 0.0, %v124
    %126 = vdwg.mxu0
    %vm127 = vcmp.ge.f32.partialorder %v116, 0.0
    %vm128 = vcmp.ge.f32.partialorder %v119, 0.0
    %vm129 = vcmp.ge.f32.partialorder %v122, 0.0
    %vm130 = vcmp.ge.f32.partialorder %v125, 0.0
    %v131 = vstv %s75
    %v132 = vmul.f32 %v131, %v116
    %v133 = vmul.f32 %v131, %v119
    %v134 = vmul.f32 %v131, %v122
    %v135 = vmul.f32 %v131, %v125
    %v136 = vsel %vm127, %v116, %v132
    %v137 = vsel %vm128, %v119, %v133
    %v138 = vsel %vm129, %v122, %v134
    %v139 = vsel %vm130, %v125, %v135
    %v140 = vadd.f32 %v136, %v137
    %v141 = vadd.f32 %v140, %v138
    %v142 = vadd.f32 %v141, %v139
    %v143 = vrot.slane %v142, 4
    %v144 = vadd.f32 %v142, %v143
    %v145 = vrot.slane %v144, 2
    %v146 = vadd.f32 %v144, %v145
    %v147 = vrot.slane %v146, 1
    %v148 = vadd.f32 %v146, %v147
    %v149 = vmul.f32 %v136, %v136
    %v150 = vmul.f32 %v137, %v137
    %v151 = vmul.f32 %v138, %v138
    %v152 = vmul.f32 %v139, %v139
    %v153 = vadd.f32 %v149, %v150
    %v154 = vadd.f32 %v153, %v151
    %v155 = vadd.f32 %v154, %v152
    %v156 = vrot.slane %v155, 4
    %v157 = vadd.f32 %v155, %v156
    %v158 = vrot.slane %v157, 2
    %v159 = vadd.f32 %v157, %v158
    %v160 = vrot.slane %v159, 1
    %v161 = vadd.f32 %v159, %v160
    %v162 = vsel %vm94, %v148, %v161
    %v163 = vld [vmem:[%s3] sm:$0xff]
    %v164 = vld [vmem:[%s3 + $0x8] sm:$0xff]
    %v165 = vld [vmem:[%s3 + $0x10] sm:$0xff]
    %v166 = vld [vmem:[%s3 + $0x18] sm:$0xff]
    %v167 = vld [vmem:[%s3 + $0x20] sm:$0xff]
    %v168 = vld [vmem:[%s3 + $0x28] sm:$0xff]
    %v169 = vld [vmem:[%s3 + $0x30] sm:$0xff]
    %v170 = vld [vmem:[%s3 + $0x38] sm:$0xff]
    %v171 = vld [vmem:[%s3 + $0x40] sm:$0xff]
    %v172 = vld [vmem:[%s3 + $0x48] sm:$0xff]
    %v173 = vld [vmem:[%s3 + $0x50] sm:$0xff]
    %v174 = vld [vmem:[%s3 + $0x58] sm:$0xff]
    %v175 = vld [vmem:[%s3 + $0x60] sm:$0xff]
    %v176 = vld [vmem:[%s3 + $0x68] sm:$0xff]
    %v177 = vld [vmem:[%s3 + $0x70] sm:$0xff]
    %v178 = vld [vmem:[%s3 + $0x78] sm:$0xff]
    %179 = vmatpush.msra.mxu0 %v178
    %180 = vmatpush.msra.mxu0 %v177
    %181 = vmatpush.msra.mxu0 %v176
    %182 = vmatpush.msra.mxu0 %v175
    %183 = vmatpush.msra.mxu0 %v174
    %184 = vmatpush.msra.mxu0 %v173
    %185 = vmatpush.msra.mxu0 %v172
    %186 = vmatpush.msra.mxu0 %v171
    %187 = vmatpush.msra.mxu0 %v170
    %188 = vmatpush.msra.mxu0 %v169
    %189 = vmatpush.msra.mxu0 %v168
    %190 = vmatpush.msra.mxu0 %v167
    %191 = vmatpush.msra.mxu0 %v166
    %192 = vmatpush.msra.mxu0 %v165
    %193 = vmatpush.msra.mxu0 %v164
    %194 = vmatpush.msra.mxu0 %v163
    %195 = vmatmul.f32.gmra.mxu0 %v162
    %v196 = vpop.f32.mrf.mxu0
    %v197 = vadd.f32 0.0, %v196
    %198 = vdwg.mxu0
    %v199 = vmul.f32 %v197, 0.00048828125
    %v200 = vmul.f32 %v199, %v199
    %v202 = vrot.slane %v200, 7
    %v204 = vsub.f32 %v199, %v202
    %v205 = vmax.f32 %v204, 0.0
    %v206 = vadd.f32 %v205, 1e-08
    %v207 = vrsqrt.pop %v206
    %v208 = vmul.f32 %v207, %v206
    %v209 = vmul.f32 %v208, %v207
    %v210 = vmul.f32 0.5, %v209
    %v211 = vsub.f32 1.5, %v210
    %v212 = vmul.f32 %v207, %v211
    %vm213 = vweird.f32 %v206
    %vm214 = vweird.f32 %v207
    %vm215 = vmor %vm213, %vm214
    %v216 = vsel %vm215, %v207, %v212
    %v217 = vsel %vm94, %v199, %v216
    %v218 = vld [vmem:[#allocation2] sm:$0xff]
    %v219 = vld [vmem:[#allocation2 + $0x8] sm:$0xff]
    %v220 = vld [vmem:[#allocation2 + $0x10] sm:$0xff]
    %v221 = vld [vmem:[#allocation2 + $0x18] sm:$0xff]
    %v222 = vld [vmem:[#allocation2 + $0x20] sm:$0xff]
    %v223 = vld [vmem:[#allocation2 + $0x28] sm:$0xff]
    %v224 = vld [vmem:[#allocation2 + $0x30] sm:$0xff]
    %v225 = vld [vmem:[#allocation2 + $0x38] sm:$0xff]
    %v226 = vld [vmem:[#allocation2 + $0x40] sm:$0xff]
    %v227 = vld [vmem:[#allocation2 + $0x48] sm:$0xff]
    %v228 = vld [vmem:[#allocation2 + $0x50] sm:$0xff]
    %v229 = vld [vmem:[#allocation2 + $0x58] sm:$0xff]
    %v230 = vld [vmem:[#allocation2 + $0x60] sm:$0xff]
    %v231 = vld [vmem:[#allocation2 + $0x68] sm:$0xff]
    %v232 = vld [vmem:[#allocation2 + $0x70] sm:$0xff]
    %v233 = vld [vmem:[#allocation2 + $0x78] sm:$0xff]
    %234 = vmatpush.msra.mxu0 %v233
    %235 = vmatpush.msra.mxu0 %v232
    %236 = vmatpush.msra.mxu0 %v231
    %237 = vmatpush.msra.mxu0 %v230
    %238 = vmatpush.msra.mxu0 %v229
    %239 = vmatpush.msra.mxu0 %v228
    %240 = vmatpush.msra.mxu0 %v227
    %241 = vmatpush.msra.mxu0 %v226
    %242 = vmatpush.msra.mxu0 %v225
    %243 = vmatpush.msra.mxu0 %v224
    %244 = vmatpush.msra.mxu0 %v223
    %245 = vmatpush.msra.mxu0 %v222
    %246 = vmatpush.msra.mxu0 %v221
    %247 = vmatpush.msra.mxu0 %v220
    %248 = vmatpush.msra.mxu0 %v219
    %249 = vmatpush.msra.mxu0 %v218
    %250 = vmatmul.f32.gmra.mxu0 %v217
    %v251 = vpop.f32.mrf.mxu0
    %v252 = vadd.f32 0.0, %v251
    %253 = vdwg.mxu0
    %v254 = vperm.slane %v252, 0
    %v255 = vsub.f32 %v136, %v254
    %v256 = vsub.f32 %v137, %v254
    %v257 = vsub.f32 %v138, %v254
    %v258 = vsub.f32 %v139, %v254
    %v259 = vperm.slane %v252, 1
    %v260 = vmul.f32 %v255, %v259
    %v261 = vmul.f32 %v256, %v259
    %v262 = vmul.f32 %v257, %v259
    %v263 = vmul.f32 %v258, %v259
    %v264 = vld [vmem:[%s2] sm:$0xff]
    %v265 = vld [vmem:[%s2 + $0x8] sm:$0xff]
    %v266 = vld [vmem:[%s2 + $0x10] sm:$0xff]
    %v267 = vld [vmem:[%s2 + $0x18] sm:$0xff]
    %269 = vset.pattern.permute.xlu0 0
    %270 = vperm.xlu0 %269, %v264
    %v271 = vpop.permute.xlu0 %270
    %274 = vset.pattern.permute.xlu0 0
    %275 = vperm.xlu0 %274, %v265
    %v276 = vpop.permute.xlu0 %275
    %279 = vset.pattern.permute.xlu0 0
    %280 = vperm.xlu0 %279, %v266
    %v281 = vpop.permute.xlu0 %280
    %284 = vset.pattern.permute.xlu0 0
    %285 = vperm.xlu0 %284, %v267
    %v286 = vpop.permute.xlu0 %285
    %v288 = vmul.f32 %v260, %v271
    %v289 = vmul.f32 %v261, %v276
    %v290 = vmul.f32 %v262, %v281
    %v291 = vmul.f32 %v263, %v286
    %s292 = scalar_lea.vmem %s2, 32
    %v293 = vld [vmem:[%s292] sm:$0xff]
    %v294 = vld [vmem:[%s292 + $0x8] sm:$0xff]
    %v295 = vld [vmem:[%s292 + $0x10] sm:$0xff]
    %v296 = vld [vmem:[%s292 + $0x18] sm:$0xff]
    %298 = vset.pattern.permute.xlu0 0
    %299 = vperm.xlu0 %298, %v293
    %v300 = vpop.permute.xlu0 %299
    %303 = vset.pattern.permute.xlu0 0
    %304 = vperm.xlu0 %303, %v294
    %v305 = vpop.permute.xlu0 %304
    %308 = vset.pattern.permute.xlu0 0
    %309 = vperm.xlu0 %308, %v295
    %v310 = vpop.permute.xlu0 %309
    %313 = vset.pattern.permute.xlu0 0
    %314 = vperm.xlu0 %313, %v296
    %v315 = vpop.permute.xlu0 %314
    %v317 = vadd.f32 %v288, %v300
    %v318 = vadd.f32 %v289, %v305
    %v319 = vadd.f32 %v290, %v310
    %v320 = vadd.f32 %v291, %v315
    %321 = vrot.lane.b32.xlu0 %v317, 2
    %v322 = vpop.permute.xlu0 %321
    %323 = vrot.lane.b32.xlu0 %v318, 2
    %v324 = vpop.permute.xlu0 %323
    %325 = vrot.lane.b32.xlu0 %v319, 2
    %v326 = vpop.permute.xlu0 %325
    %327 = vrot.lane.b32.xlu0 %v320, 2
    %v328 = vpop.permute.xlu0 %327
    %vm329 = vcmp.ge.s32.totalorder %v74, 2
    %v330 = vsel %vm329, 1, 0
    %vm331 = vcmp.eq.s32.totalorder %v330, 1
    %v332 = vsel %vm331, %v322, 0.0
    %v333 = vsel %vm331, %v324, 0.0
    %v334 = vsel %vm331, %v326, 0.0
    %v335 = vsel %vm331, %v328, 0.0
    %s336 = scalar_lea.vmem %s2, 64
    %v337 = vld [vmem:[%s336] sm:$0xff]
    %v338 = vld [vmem:[%s336 + $0x8] sm:$0xff]
    %v339 = vld [vmem:[%s336 + $0x10] sm:$0xff]
    %v340 = vld [vmem:[%s336 + $0x18] sm:$0xff]
    %342 = vset.pattern.permute.xlu0 0
    %343 = vperm.xlu0 %342, %v337
    %v344 = vpop.permute.xlu0 %343
    %347 = vset.pattern.permute.xlu0 0
    %348 = vperm.xlu0 %347, %v338
    %v349 = vpop.permute.xlu0 %348
    %352 = vset.pattern.permute.xlu0 0
    %353 = vperm.xlu0 %352, %v339
    %v354 = vpop.permute.xlu0 %353
    %357 = vset.pattern.permute.xlu0 0
    %358 = vperm.xlu0 %357, %v340
    %v359 = vpop.permute.xlu0 %358
    %v361 = vmul.f32 %v344, %v332
    %v362 = vmul.f32 %v349, %v333
    %v363 = vmul.f32 %v354, %v334
    %v364 = vmul.f32 %v359, %v335
    %v365 = vadd.f32 %v361, 0.0
    %v366 = vadd.f32 %v362, 0.0
    %v367 = vadd.f32 %v363, 0.0
    %v368 = vadd.f32 %v364, 0.0
    %s369 = scalar_lea.vmem %s2, 96
    %v370 = vld [vmem:[%s369] sm:$0xff]
    %v371 = vld [vmem:[%s369 + $0x8] sm:$0xff]
    %v372 = vld [vmem:[%s369 + $0x10] sm:$0xff]
    %v373 = vld [vmem:[%s369 + $0x18] sm:$0xff]
    %375 = vset.pattern.permute.xlu0 0
    %376 = vperm.xlu0 %375, %v370
    %v377 = vpop.permute.xlu0 %376
    %380 = vset.pattern.permute.xlu0 0
    %381 = vperm.xlu0 %380, %v371
    %v382 = vpop.permute.xlu0 %381
    %385 = vset.pattern.permute.xlu0 0
    %386 = vperm.xlu0 %385, %v372
    %v387 = vpop.permute.xlu0 %386
    %390 = vset.pattern.permute.xlu0 0
    %391 = vperm.xlu0 %390, %v373
    %v392 = vpop.permute.xlu0 %391
    %v394 = vmul.f32 %v377, %v317
    %v395 = vmul.f32 %v382, %v318
    %v396 = vmul.f32 %v387, %v319
    %v397 = vmul.f32 %v392, %v320
    %v398 = vadd.f32 %v365, %v394
    %v399 = vadd.f32 %v366, %v395
    %v400 = vadd.f32 %v367, %v396
    %v401 = vadd.f32 %v368, %v397
    %402 = vrot.lane.b32.xlu0 %v317, 126
    %v403 = vpop.permute.xlu0 %402
    %404 = vrot.lane.b32.xlu0 %v318, 126
    %v405 = vpop.permute.xlu0 %404
    %406 = vrot.lane.b32.xlu0 %v319, 126
    %v407 = vpop.permute.xlu0 %406
    %408 = vrot.lane.b32.xlu0 %v320, 126
    %v409 = vpop.permute.xlu0 %408
    %vm410 = vcmp.lt.s32.totalorder %v74, 62
    %v411 = vsel %vm410, 1, 0
    %vm412 = vcmp.eq.s32.totalorder %v411, 1
    %v413 = vsel %vm412, %v403, 0.0
    %v414 = vsel %vm412, %v405, 0.0
    %v415 = vsel %vm412, %v407, 0.0
    %v416 = vsel %vm412, %v409, 0.0
    %s417 = scalar_lea.vmem %s2, 128
    %v418 = vld [vmem:[%s417] sm:$0xff]
    %v419 = vld [vmem:[%s417 + $0x8] sm:$0xff]
    %v420 = vld [vmem:[%s417 + $0x10] sm:$0xff]
    %v421 = vld [vmem:[%s417 + $0x18] sm:$0xff]
    %423 = vset.pattern.permute.xlu0 0
    %424 = vperm.xlu0 %423, %v418
    %v425 = vpop.permute.xlu0 %424
    %428 = vset.pattern.permute.xlu0 0
    %429 = vperm.xlu0 %428, %v419
    %v430 = vpop.permute.xlu0 %429
    %433 = vset.pattern.permute.xlu0 0
    %434 = vperm.xlu0 %433, %v420
    %v435 = vpop.permute.xlu0 %434
    %438 = vset.pattern.permute.xlu0 0
    %439 = vperm.xlu0 %438, %v421
    %v440 = vpop.permute.xlu0 %439
    %v442 = vmul.f32 %v425, %v413
    %v443 = vmul.f32 %v430, %v414
    %v444 = vmul.f32 %v435, %v415
    %v445 = vmul.f32 %v440, %v416
    %v446 = vadd.f32 %v398, %v442
    %v447 = vadd.f32 %v399, %v443
    %v448 = vadd.f32 %v400, %v444
    %v449 = vadd.f32 %v401, %v445
    %s450 = scalar_lea.vmem %s2, 160
    %v451 = vld [vmem:[%s450] sm:$0xff]
    %v452 = vld [vmem:[%s450 + $0x8] sm:$0xff]
    %v453 = vld [vmem:[%s450 + $0x10] sm:$0xff]
    %v454 = vld [vmem:[%s450 + $0x18] sm:$0xff]
    %456 = vset.pattern.permute.xlu0 0
    %457 = vperm.xlu0 %456, %v451
    %v458 = vpop.permute.xlu0 %457
    %461 = vset.pattern.permute.xlu0 0
    %462 = vperm.xlu0 %461, %v452
    %v463 = vpop.permute.xlu0 %462
    %466 = vset.pattern.permute.xlu0 0
    %467 = vperm.xlu0 %466, %v453
    %v468 = vpop.permute.xlu0 %467
    %471 = vset.pattern.permute.xlu0 0
    %472 = vperm.xlu0 %471, %v454
    %v473 = vpop.permute.xlu0 %472
    %v475 = vadd.f32 %v446, %v458
    %v476 = vadd.f32 %v447, %v463
    %v477 = vadd.f32 %v448, %v468
    %v478 = vadd.f32 %v449, %v473
    %vm479 = vcmp.ge.f32.partialorder %v475, 0.0
    %vm480 = vcmp.ge.f32.partialorder %v476, 0.0
    %vm481 = vcmp.ge.f32.partialorder %v477, 0.0
    %vm482 = vcmp.ge.f32.partialorder %v478, 0.0
    %v483 = vstv %s76
    %v484 = vmul.f32 %v483, %v475
    %v485 = vmul.f32 %v483, %v476
    %v486 = vmul.f32 %v483, %v477
    %v487 = vmul.f32 %v483, %v478
    %v488 = vsel %vm479, %v475, %v484
    %v489 = vsel %vm480, %v476, %v485
    %v490 = vsel %vm481, %v477, %v486
    %v491 = vsel %vm482, %v478, %v487
    %v492 = vadd.f32 %v488, %v489
    %v493 = vadd.f32 %v492, %v490
    %v494 = vadd.f32 %v493, %v491
    %v495 = vrot.slane %v494, 4
    %v496 = vadd.f32 %v494, %v495
    %v497 = vrot.slane %v496, 2
    %v498 = vadd.f32 %v496, %v497
    %v499 = vrot.slane %v498, 1
    %v500 = vadd.f32 %v498, %v499
    %v501 = vmul.f32 %v488, %v488
    %v502 = vmul.f32 %v489, %v489
    %v503 = vmul.f32 %v490, %v490
    %v504 = vmul.f32 %v491, %v491
    %v505 = vadd.f32 %v501, %v502
    %v506 = vadd.f32 %v505, %v503
    %v507 = vadd.f32 %v506, %v504
    %v508 = vrot.slane %v507, 4
    %v509 = vadd.f32 %v507, %v508
    %v510 = vrot.slane %v509, 2
    %v511 = vadd.f32 %v509, %v510
    %v512 = vrot.slane %v511, 1
    %v513 = vadd.f32 %v511, %v512
    %v514 = vsel %vm94, %v500, %v513
    %515 = vmatpush.msra.mxu0 %v178
    %516 = vmatpush.msra.mxu0 %v177
    %517 = vmatpush.msra.mxu0 %v176
    %518 = vmatpush.msra.mxu0 %v175
    %519 = vmatpush.msra.mxu0 %v174
    %520 = vmatpush.msra.mxu0 %v173
    %521 = vmatpush.msra.mxu0 %v172
    %522 = vmatpush.msra.mxu0 %v171
    %523 = vmatpush.msra.mxu0 %v170
    %524 = vmatpush.msra.mxu0 %v169
    %525 = vmatpush.msra.mxu0 %v168
    %526 = vmatpush.msra.mxu0 %v167
    %527 = vmatpush.msra.mxu0 %v166
    %528 = vmatpush.msra.mxu0 %v165
    %529 = vmatpush.msra.mxu0 %v164
    %530 = vmatpush.msra.mxu0 %v163
    %531 = vmatmul.f32.gmra.mxu0 %v514
    %v532 = vpop.f32.mrf.mxu0
    %v533 = vadd.f32 0.0, %v532
    %534 = vdwg.mxu0
    %v535 = vmul.f32 %v533, 0.00048828125
    %v536 = vmul.f32 %v535, %v535
    %v538 = vrot.slane %v536, 7
    %v540 = vsub.f32 %v535, %v538
    %v541 = vmax.f32 %v540, 0.0
    %v542 = vadd.f32 %v541, 1e-08
    %v543 = vrsqrt.pop %v542
    %v544 = vmul.f32 %v543, %v542
    %v545 = vmul.f32 %v544, %v543
    %v546 = vmul.f32 0.5, %v545
    %v547 = vsub.f32 1.5, %v546
    %v548 = vmul.f32 %v543, %v547
    %vm549 = vweird.f32 %v542
    %vm550 = vweird.f32 %v543
    %vm551 = vmor %vm549, %vm550
    %v552 = vsel %vm551, %v543, %v548
    %v553 = vsel %vm94, %v535, %v552
    %554 = vmatpush.msra.mxu0 %v233
    %555 = vmatpush.msra.mxu0 %v232
    %556 = vmatpush.msra.mxu0 %v231
    %557 = vmatpush.msra.mxu0 %v230
    %558 = vmatpush.msra.mxu0 %v229
    %559 = vmatpush.msra.mxu0 %v228
    %560 = vmatpush.msra.mxu0 %v227
    %561 = vmatpush.msra.mxu0 %v226
    %562 = vmatpush.msra.mxu0 %v225
    %563 = vmatpush.msra.mxu0 %v224
    %564 = vmatpush.msra.mxu0 %v223
    %565 = vmatpush.msra.mxu0 %v222
    %566 = vmatpush.msra.mxu0 %v221
    %567 = vmatpush.msra.mxu0 %v220
    %568 = vmatpush.msra.mxu0 %v219
    %569 = vmatpush.msra.mxu0 %v218
    %570 = vmatmul.f32.gmra.mxu0 %v553
    %v571 = vpop.f32.mrf.mxu0
    %v572 = vadd.f32 0.0, %v571
    %573 = vdwg.mxu0
    %v574 = vperm.slane %v572, 0
    %v575 = vsub.f32 %v488, %v574
    %v576 = vsub.f32 %v489, %v574
    %v577 = vsub.f32 %v490, %v574
    %v578 = vsub.f32 %v491, %v574
    %v579 = vperm.slane %v572, 1
    %v580 = vmul.f32 %v575, %v579
    %v581 = vmul.f32 %v576, %v579
    %v582 = vmul.f32 %v577, %v579
    %v583 = vmul.f32 %v578, %v579
    %v584 = vld [vmem:[%s5] sm:$0xff]
    %v585 = vld [vmem:[%s5 + $0x8] sm:$0xff]
    %v586 = vld [vmem:[%s6] sm:$0xff]
    %v587 = vld [vmem:[%s6 + $0x8] sm:$0xff]
    %589 = vset.pattern.permute.xlu0 0
    %590 = vperm.xlu0 %589, %v586
    %v591 = vpop.permute.xlu0 %590
    %594 = vset.pattern.permute.xlu0 0
    %595 = vperm.xlu0 %594, %v587
    %v596 = vpop.permute.xlu0 %595
    %vm598 = vcmask 261120
    %v600 = vsel %vm598, %v584, 0
    %v603 = vsel %vm598, %v585, 0
    %605 = vmatpush.msra.mxu0 0.0
    %606 = vmatpush.msra.mxu0 0.0
    %607 = vmatpush.msra.mxu0 0.0
    %608 = vmatpush.msra.mxu0 0.0
    %609 = vmatpush.msra.mxu0 0.0
    %610 = vmatpush.msra.mxu0 0.0
    %611 = vmatpush.msra.mxu0 0.0
    %612 = vmatpush.msra.mxu0 0.0
    %613 = vmatpush.msra.mxu0 0.0
    %614 = vmatpush.msra.mxu0 0.0
    %615 = vmatpush.msra.mxu0 0.0
    %616 = vmatpush.msra.mxu0 0.0
    %617 = vmatpush.msra.mxu0 %v583
    %618 = vmatpush.msra.mxu0 %v582
    %619 = vmatpush.msra.mxu0 %v581
    %620 = vmatpush.msra.mxu0 %v580
    %621 = vmatmul.f32.gmra.mxu0 %v600
    %v622 = vpop.f32.mrf.mxu0
    %v623 = vadd.f32 %v591, %v622
    %624 = vmatmul.f32.gmra.mxu0 %v603
    %v625 = vpop.f32.mrf.mxu0
    %v626 = vadd.f32 %v596, %v625
    %627 = vdwg.mxu0
    %628 = vst [vmem:[#allocation7] sm:$0xff] %v623
    %629 = vst [vmem:[#allocation7 + $0x8] sm:$0xff] %v626
    // Predicated region
    $region42: #{tpu_custom_call.1} parent=1 // pred_check
      _
    $region43: #{tpu_custom_call.1} parent=1 // pred_check_branch
      %631 = sbr.rel (0) target = $region45
    $region44: #{tpu_custom_call.1} parent=1 // pred_region
      %633 = vsyncadd [#allocation4], 0
      %s634 = sshll.u32 [#allocation7], 4
      %s635 = int_to_ptr.vmem [resolvable:$true] %s634
      %s636 = sshll.u32 %s8, 4
      %s637 = int_to_ptr.hbm [resolvable:$true] %s636
      %642 = dma.vmem_to_hbm [thread:$0]  %s635, 256, %s637, [#allocation4], 128, 128, 8
    $region45: #{tpu_custom_call.1} parent=1 // pred_fallthru
      _
    // Predicated region
    $region46: #{tpu_custom_call.1} parent=1 // pred_check
      _
    $region47: #{tpu_custom_call.1} parent=1 // pred_check_branch
      %644 = sbr.rel (0) target = $region49
    $region48: #{tpu_custom_call.1} parent=1 // pred_region
      %646 = dma.done [#allocation4], 256
    $region49: #{tpu_custom_call.1} parent=1 // pred_fallthru
      _
    %647 = vsyncpa [#allocation3], 1
    %648 = vsyncpa [#allocation4], 1
    %649 = vsyncpa [#allocation5], 1

</llo_original>
